<compile_context>
chip_gen: v7x
topology: tpu7x:2x2x1
jax: 0.10.0
libtpu: 0.0.40
codegen_flags: <defaults>
</compile_context>

<pallas_src>
import jax
import jax.numpy as jnp
import numpy as np
from jax import lax
from jax.experimental import pallas as pl
from jax.experimental.pallas import tpu as pltpu


def _make_kernel(c_out: int):
    def kernel(x_ref, w01_ref, b01_ref, w2bd_ref, out_ref):
        # x block: (TB, C, HW) in its native dtype.  Global-average-pool sum,
        # accumulated in f32 (the 1/HW scale is folded into w01).
        pooled_sum = jnp.sum(x_ref[...].astype(jnp.float32), axis=-1)   # (TB, C)

        # 1x1 conv (+bias) and the stacked first FC layers of both heads are
        # folded into a single (C, 2C) operand + (1, 2C) bias in the wrapper:
        #   h = relu(pooled_sum @ W01 + b01)
        h = jnp.maximum(
            jnp.dot(pooled_sum, w01_ref[...],
                    preferred_element_type=jnp.float32) + b01_ref[...], 0.0)

        # Block-diagonal second layers of the two heads -> one MXU dot.
        # (Fine while C_out is small; split into two dots if the heads grow.)
        z = jnp.dot(h, w2bd_ref[...], preferred_element_type=jnp.float32)

        # Single fused lane-dense store: lanes [0, c_out) are the sigmoid head,
        # lanes [c_out, 2*c_out) the tanh head (split in the wrapper).  Avoids
        # non-tile-aligned lane slices and halves output DMA count.
        lane = lax.broadcasted_iota(jnp.int32, z.shape, 1)
        fused = jnp.where(lane < c_out, jax.nn.sigmoid(z), jnp.tanh(z))
        out_ref[0] = fused.astype(out_ref.dtype)

    return kernel


def _round_up(x: int, m: int) -> int:
    return (x + m - 1) // m * m


def _pick_tb(b: int, c: int, hw: int, itemsize: int,
             *, target_block_bytes: int = 8 << 20) -> int:
    """Batch-tile rows per grid step, sized against a VMEM byte budget.

    Uses the *padded* per-row footprint (sublane/lane tile padding) so the
    budget reflects actual VMEM occupancy, not logical bytes.
    """
    sublane = max(1, 32 // itemsize)            # f32 -> 8, bf16 -> 16, int8 -> 32
    padded_row_bytes = _round_up(c, sublane) * _round_up(hw, 128) * itemsize
    tb = max(1, target_block_bytes // padded_row_bytes)
    return int(min(b, tb))


def scale_n_layer(x, params, *, tb=None):
    """x: (B, C, H, W), any float dtype.  Returns (w, wb), each (B, C_out, 1, 1) f32."""
    B, C, H, W = x.shape
    HW = H * W
    inv_hw = 1.0 / float(HW)

    conv_w = params["conv_w"].astype(jnp.float32)     # (C, C)   (out, in)
    conv_b = params["conv_b"].astype(jnp.float32)     # (C, 1)
    w1a = params["fc1_w1"].astype(jnp.float32)        # (C, C)
    w2a = params["fc1_w2"].astype(jnp.float32)        # (C_out, C)
    w1b = params["fc2_w1"].astype(jnp.float32)        # (C, C)
    w2b = params["fc2_w2"].astype(jnp.float32)        # (C_out, C)
    C_out = w2a.shape[0]

    # --- one-time weight packing (layout plumbing, outside the kernel) ---
    # Stack the first FC layers of both heads: (C, 2C).
    w1s = jnp.concatenate([w1a, w1b], axis=0).T
    # Fold the pool scale and the 1x1 conv + bias into that first layer:
    #   relu((mean(x) @ Wc^T + b_row) @ W1s)
    #     == relu(sum(x) @ (inv_hw * Wc^T @ W1s) + b_row @ W1s)
    w01 = (inv_hw * conv_w.T) @ w1s                    # (C, 2C)
    b01 = conv_b.reshape(1, C) @ w1s                   # (1, 2C)
    # Block-diagonal second layers of the two heads: (2C, 2*C_out).
    w2bd = jnp.zeros((2 * C, 2 * C_out), jnp.float32)
    w2bd = w2bd.at[:C, :C_out].set(w2a.T)
    w2bd = w2bd.at[C:, C_out:].set(w2b.T)

    # --- batch tiling sized against VMEM (no tiny fixed cap) ---
    if tb is None:
        tb = _pick_tb(B, C, HW, x.dtype.itemsize)
    nb = -(-B // tb)                 # ceil-div; pad awkward B instead of TB=1
    B_pad = nb * tb

    # Keep x in its native dtype: reshape only, no extra HBM cast pass.
    x_flat = x.reshape(B, C, HW)
    if B_pad != B:
        x_flat = jnp.pad(x_flat, ((0, B_pad - B), (0, 0), (0, 0)))

    kernel = _make_kernel(C_out)

    fused = pl.pallas_call(
        kernel,
        out_shape=jax.ShapeDtypeStruct((nb, tb, 2 * C_out), jnp.float32),
        grid_spec=pl.GridSpec(
            grid=(nb,),
            in_specs=[
                pl.BlockSpec((tb, C, HW), lambda b: (b, 0, 0)),       # x batch block
                pl.BlockSpec((C, 2 * C), lambda b: (0, 0)),           # folded conv+fc1
                pl.BlockSpec((1, 2 * C), lambda b: (0, 0)),           # folded bias
                pl.BlockSpec((2 * C, 2 * C_out), lambda b: (0, 0)),   # block-diag fc2
            ],
            out_specs=pl.BlockSpec((1, tb, 2 * C_out), lambda b: (b, 0, 0)),
        ),
        compiler_params=pltpu.CompilerParams(
            dimension_semantics=("parallel",),
            vmem_limit_bytes=32 * 1024 * 1024),
    )(x_flat, w01, b01, w2bd)

    fused = fused.reshape(B_pad, 2 * C_out)[:B]
    w_out = fused[:, :C_out].reshape(B, C_out, 1, 1)
    wb_out = fused[:, C_out:].reshape(B, C_out, 1, 1)
    return w_out, wb_out


def reference(x, params):
    """Pure-JAX reference mirroring the original forward (conv -> pool -> heads)."""
    B, C, H, W = x.shape
    xf = x.astype(jnp.float32)
    conv = jnp.einsum("oc,bchw->bohw", params["conv_w"].astype(jnp.float32), xf) \
        + params["conv_b"].astype(jnp.float32).reshape(1, C, 1, 1)
    y = conv.mean(axis=(2, 3))                                   # (B, C)
    h1 = jnp.maximum(y @ params["fc1_w1"].T, 0.0)
    w = jax.nn.sigmoid(h1 @ params["fc1_w2"].T)                  # (B, C_out)
    h2 = jnp.maximum(y @ params["fc2_w1"].T, 0.0)
    wb = jnp.tanh(h2 @ params["fc2_w2"].T)                       # (B, C_out)
    C_out = w.shape[1]
    return w.reshape(B, C_out, 1, 1), wb.reshape(B, C_out, 1, 1)


if __name__ == "__main__":
    B, C_in, C_out, H, W = 2, 4, 8, 16, 16

    key = jax.random.PRNGKey(0)
    keys = jax.random.split(key, 7)

    x = jax.random.normal(keys[0], (B, C_in, H, W), dtype=jnp.float32)

    params = {
        "conv_w": 0.1 * jax.random.normal(keys[1], (C_in, C_in), jnp.float32),
        "conv_b": 0.1 * jax.random.normal(keys[2], (C_in, 1), jnp.float32),
        "fc1_w1": 0.1 * jax.random.normal(keys[3], (C_in, C_in), jnp.float32),
        "fc1_w2": 0.1 * jax.random.normal(keys[4], (C_out, C_in), jnp.float32),
        "fc2_w1": 0.1 * jax.random.normal(keys[5], (C_in, C_in), jnp.float32),
        "fc2_w2": 0.1 * jax.random.normal(keys[6], (C_out, C_in), jnp.float32),
    }

    w_k, wb_k = scale_n_layer(x, params)
    jax.block_until_ready((w_k, wb_k))

    w_r, wb_r = reference(x, params)
    np.testing.assert_allclose(np.asarray(w_k), np.asarray(w_r),
                               rtol=1e-5, atol=1e-5)
    np.testing.assert_allclose(np.asarray(wb_k), np.asarray(wb_r),
                               rtol=1e-5, atol=1e-5)

    assert w_k.shape == (B, C_out, 1, 1) and wb_k.shape == (B, C_out, 1, 1)
    print("KERNEL_OK")
</pallas_src>

<mosaic_0001>
module attributes {stable_mosaic.version = 11 : i64} {
  func.func @kernel(%arg0: i32, %arg1: memref<2x4x256xf32, #tpu.memory_space<vmem>>, %arg2: memref<4x8xf32, #tpu.memory_space<vmem>>, %arg3: memref<1x8xf32, #tpu.memory_space<vmem>>, %arg4: memref<8x16xf32, #tpu.memory_space<vmem>>, %arg5: memref<1x2x16xf32, #tpu.memory_space<vmem>>) attributes {dimension_semantics = [#tpu.dimension_semantics<parallel>], iteration_bounds = array<i64: 1>, scalar_prefetch = 0 : i64, scratch_operands = 0 : i64, tpu.core_type = #tpu.core_type<tc>, window_params = [{transform_indices = @transform_0, window_bounds = array<i64: 2, 4, 256>}, {pipeline_mode = #tpu.pipeline_mode<synchronous>, transform_indices = @transform_1, window_bounds = array<i64: 4, 8>}, {pipeline_mode = #tpu.pipeline_mode<synchronous>, transform_indices = @transform_2, window_bounds = array<i64: 1, 8>}, {pipeline_mode = #tpu.pipeline_mode<synchronous>, transform_indices = @transform_3, window_bounds = array<i64: 8, 16>}, {transform_indices = @transform_4, window_bounds = array<i64: 1, 2, 16>}]} {
    %c0 = arith.constant 0 : index
    %c0_0 = arith.constant 0 : index
    %c0_1 = arith.constant 0 : index
    %0 = vector.load %arg1[%c0, %c0_0, %c0_1] : memref<2x4x256xf32, #tpu.memory_space<vmem>>, vector<2x4x256xf32>
    %cst = arith.constant dense<0.000000e+00> : vector<2x4xf32>
    %1 = vector.multi_reduction <add>, %0, %cst [2] : vector<2x4x256xf32> to vector<2x4xf32>
    %c0_2 = arith.constant 0 : index
    %c0_3 = arith.constant 0 : index
    %2 = vector.load %arg2[%c0_2, %c0_3] : memref<4x8xf32, #tpu.memory_space<vmem>>, vector<4x8xf32>
    %cst_4 = arith.constant dense<0.000000e+00> : vector<2x8xf32>
    %3 = tpu.matmul %1, %2, %cst_4 {dimension_numbers = #tpu.dot_dimension_numbers<[1], [0], [0], [1], [0, 0, 1, 1], [], []>} : vector<2x4xf32>, vector<4x8xf32>, vector<2x8xf32> -> vector<2x8xf32>
    %c0_5 = arith.constant 0 : index
    %c0_6 = arith.constant 0 : index
    %4 = vector.load %arg3[%c0_5, %c0_6] : memref<1x8xf32, #tpu.memory_space<vmem>>, vector<1x8xf32>
    %5 = vector.broadcast %4 : vector<1x8xf32> to vector<2x8xf32>
    %6 = arith.addf %3, %5 : vector<2x8xf32>
    %cst_7 = arith.constant 0.000000e+00 : f32
    %7 = vector.broadcast %cst_7 : f32 to vector<2x8xf32>
    %8 = arith.maximumf %6, %7 : vector<2x8xf32>
    %c0_8 = arith.constant 0 : index
    %c0_9 = arith.constant 0 : index
    %9 = vector.load %arg4[%c0_8, %c0_9] : memref<8x16xf32, #tpu.memory_space<vmem>>, vector<8x16xf32>
    %cst_10 = arith.constant dense<0.000000e+00> : vector<2x16xf32>
    %10 = tpu.matmul %8, %9, %cst_10 {dimension_numbers = #tpu.dot_dimension_numbers<[1], [0], [0], [1], [0, 0, 1, 1], [], []>} : vector<2x8xf32>, vector<8x16xf32>, vector<2x16xf32> -> vector<2x16xf32>
    %11 = tpu.iota {dimensions = array<i32: 1>} : vector<2x16xi32>
    %c8_i32 = arith.constant 8 : i32
    %12 = vector.broadcast %c8_i32 : i32 to vector<2x16xi32>
    %13 = arith.cmpi slt, %11, %12 : vector<2x16xi32>
    %14 = arith.negf %10 : vector<2x16xf32>
    %15 = math.exp %14 : vector<2x16xf32>
    %cst_11 = arith.constant 1.000000e+00 : f32
    %16 = vector.broadcast %cst_11 : f32 to vector<2x16xf32>
    %17 = arith.addf %16, %15 : vector<2x16xf32>
    %18 = arith.divf %16, %17 : vector<2x16xf32>
    %19 = math.tanh %10 : vector<2x16xf32>
    %20 = arith.select %13, %18, %19 : vector<2x16xi1>, vector<2x16xf32>
    %c0_12 = arith.constant 0 : index
    %c0_13 = arith.constant 0 : index
    %c0_14 = arith.constant 0 : index
    %21 = vector.load %arg5[%c0_12, %c0_13, %c0_14] : memref<1x2x16xf32, #tpu.memory_space<vmem>>, vector<1x2x16xf32>
    %22 = vector.shape_cast %21 : vector<1x2x16xf32> to vector<2x16xf32>
    %23 = vector.shape_cast %20 : vector<2x16xf32> to vector<1x2x16xf32>
    tpu.vector_store %arg5[%c0_12, %c0_13, %c0_14], %23 {strides = array<i32>} : memref<1x2x16xf32, #tpu.memory_space<vmem>>, vector<1x2x16xf32>,
    return
  }
  func.func @transform_0(%arg0: i32) -> (i32, i32, i32) {
    %c0_i32 = arith.constant 0 : i32
    %c0_i32_0 = arith.constant 0 : i32
    %c0_i32_1 = arith.constant 0 : i32
    return %arg0, %c0_i32, %c0_i32_0 : i32, i32, i32
  }
  func.func @transform_1(%arg0: i32) -> (i32, i32) {
    %c0_i32 = arith.constant 0 : i32
    %c0_i32_0 = arith.constant 0 : i32
    %c0_i32_1 = arith.constant 0 : i32
    return %c0_i32, %c0_i32_0 : i32, i32
  }
  func.func @transform_2(%arg0: i32) -> (i32, i32) {
    %c0_i32 = arith.constant 0 : i32
    %c0_i32_0 = arith.constant 0 : i32
    %c0_i32_1 = arith.constant 0 : i32
    return %c0_i32, %c0_i32_0 : i32, i32
  }
  func.func @transform_3(%arg0: i32) -> (i32, i32) {
    %c0_i32 = arith.constant 0 : i32
    %c0_i32_0 = arith.constant 0 : i32
    %c0_i32_1 = arith.constant 0 : i32
    return %c0_i32, %c0_i32_0 : i32, i32
  }
  func.func @transform_4(%arg0: i32) -> (i32, i32, i32) {
    %c0_i32 = arith.constant 0 : i32
    %c0_i32_0 = arith.constant 0 : i32
    %c0_i32_1 = arith.constant 0 : i32
    return %arg0, %c0_i32, %c0_i32_0 : i32, i32, i32
  }
}

</mosaic_0001>

<llo_original>
// kernel: tpu_custom_call.1
$region0: #{tpu_custom_call.1}
  #allocation0 [shape = 'u32[]', space=smem, size = 0x4, offset = 0x4, fixed_abs, tag = 'smem constant byte address 0x4 - core index']
  #allocation1 [shape = 'u32[144,128]{1,0:T(1,128)}', space=vmem, size = 0x12000, scoped, tag = 'internal scratch']
  %s0 = inlined_call_operand.hbm [shape: f32[2,4,256], index: 0, kind: input, shape index: {}]
  %s1 = inlined_call_operand.hbm [shape: f32[4,8], index: 1, kind: input, shape index: {}]
  %s2 = inlined_call_operand.vmem [shape: f32[1,8], index: 2, kind: input, shape index: {}]
  %s3 = inlined_call_operand.vmem [shape: f32[8,16], index: 3, kind: input, shape index: {}]
  %s4 = inlined_call_operand.hbm [shape: f32[1,2,16], index: 4, kind: output, shape index: {}]
  %s5 = sld [smem:[#allocation0]]
  $region34: #{tpu_custom_call.1} parent=0
    _
  %s7 = ssub.s32 1, %s5
  %s8 = scalar_select 0, %s7, %s5
  $region1: #{tpu_custom_call.1} parent=0
    #allocation2 [shape = 'u8[8192]{0}', space=vmem, size = 0x2000, scoped, tag = 'input window, operand 0, single buffered']
    #allocation3 [shape = 's32[1]{0}', space=sflag, size = 0x4, scoped, tag = 'scoped memory for tpu_custom_call.1']
    #allocation4 [shape = 's32[1]{0}', space=sflag, size = 0x4, scoped, tag = 'scoped memory for tpu_custom_call.1']
    #allocation5 [shape = 'u8[2048]{0}', space=vmem, size = 0x800, scoped, tag = 'input window, operand 1, single buffered']
    #allocation6 [shape = 's32[1]{0}', space=sflag, size = 0x4, scoped, tag = 'scoped memory for tpu_custom_call.1']
    #allocation7 [shape = 'u8[1024]{0}', space=vmem, size = 0x400, scoped, tag = 'output window, operand 0, single buffered']
    %9 = vsyncpa [#allocation3], 0
    %10 = vsyncpa [#allocation6], 0
    %11 = vsyncpa [#allocation4], 0
    // Predicated region
    $region2: #{tpu_custom_call.1} parent=1 // pred_check
      _
    $region3: #{tpu_custom_call.1} parent=1 // pred_check_branch
      %13 = sbr.rel (0) target = $region5
    $region4: #{tpu_custom_call.1} parent=1 // pred_region
      %s15 = ssub.s32 256, 256
      %16 = vsyncadd [#allocation3], %s15
      %s17 = sshll.u32 [#allocation2], 4
      %s18 = int_to_ptr.vmem [resolvable:$true] %s17
      %23 = dma.hbm_to_vmem [thread:$0]  %s0, 256, %s18, [#allocation3], 128, 128, 8
    $region5: #{tpu_custom_call.1} parent=1 // pred_fallthru
      _
    // Predicated region
    $region6: #{tpu_custom_call.1} parent=1 // pred_check
      _
    $region7: #{tpu_custom_call.1} parent=1 // pred_check_branch
      %25 = sbr.rel (0) target = $region9
    $region8: #{tpu_custom_call.1} parent=1 // pred_region
      %s27 = ssub.s32 64, 64
      %28 = vsyncadd [#allocation6], %s27
      %s30 = sshll.u32 [#allocation5], 4
      %s31 = int_to_ptr.vmem [resolvable:$true] %s30
      %33 = dma.hbm_to_vmem [thread:$0]  %s1, 64, %s31, [#allocation6]
    $region9: #{tpu_custom_call.1} parent=1 // pred_fallthru
      _
    // Predicated region
    $region10: #{tpu_custom_call.1} parent=1 // pred_check
      _
    $region11: #{tpu_custom_call.1} parent=1 // pred_check_branch
      %35 = sbr.rel (0) target = $region13
    $region12: #{tpu_custom_call.1} parent=1 // pred_region
      _
    $region13: #{tpu_custom_call.1} parent=1 // pred_fallthru
      _
    // Predicated region
    $region14: #{tpu_custom_call.1} parent=1 // pred_check
      _
    $region15: #{tpu_custom_call.1} parent=1 // pred_check_branch
      %37 = sbr.rel (0) target = $region17
    $region16: #{tpu_custom_call.1} parent=1 // pred_region
      _
    $region17: #{tpu_custom_call.1} parent=1 // pred_fallthru
      _
    // Predicated region
    $region18: #{tpu_custom_call.1} parent=1 // pred_check
      _
    $region19: #{tpu_custom_call.1} parent=1 // pred_check_branch
      %39 = sbr.rel (0) target = $region21
    $region20: #{tpu_custom_call.1} parent=1 // pred_region
      %40 = dma.done [#allocation3], 256
    $region21: #{tpu_custom_call.1} parent=1 // pred_fallthru
      _
    // Predicated region
    $region22: #{tpu_custom_call.1} parent=1 // pred_check
      _
    $region23: #{tpu_custom_call.1} parent=1 // pred_check_branch
      %42 = sbr.rel (0) target = $region25
    $region24: #{tpu_custom_call.1} parent=1 // pred_region
      %43 = dma.done [#allocation6], 64
    $region25: #{tpu_custom_call.1} parent=1 // pred_fallthru
      _
    %v44 = vld [vmem:[#allocation2] sm:$0xff]
    %v45 = vld [vmem:[#allocation2 + $0x8] sm:$0xff]
    %v48 = vcombine.high %v44, %v44
    %v49 = vcombine.high %v45, %v45
    %vm52 = vcmask 1043456
    %v53 = vsel %vm52, %v44, 0.0
    %v54 = vsel %vm52, %v48, 0.0
    %v55 = vadd.f32 %v53, %v54
    %56 = vadd.xlane.f32.xlu0 %v55
    %v57 = vpop.xlane.xlu0 %56
    %v58 = vsel %vm52, %v45, 0.0
    %v59 = vsel %vm52, %v49, 0.0
    %v60 = vadd.f32 %v58, %v59
    %61 = vadd.xlane.f32.xlu0 %v60
    %v62 = vpop.xlane.xlu0 %61
    %v63 = vld [vmem:[#allocation5] sm:$0xf]
    %v64 = vld [vmem:[%s2] sm:$0x1]
    %v66 = vlaneseq
    %v67 = vshrl.u32 %v66, 7
    %v68 = vsub.s32 0, %v67
    %v69 = vrot.slane %v64, %v68
    %v73 = vlaneseq
    %v74 = vand.u32 %v73, 127
    %v75 = vlaneseq
    %v76 = vshrl.u32 %v75, 7
    %v77 = vsub.s32 %v74, %v76
    %v78 = vrot.slane %v57, %v77
    %v79 = vlaneseq
    %v80 = vshrl.u32 %v79, 7
    %v81 = vsub.s32 %v74, %v80
    %v82 = vrot.slane %v62, %v81
    %vm83 = vcmask 1041409
    %v84 = vsel %vm83, %v82, %v78
    %vm85 = vcmask 31744
    %v86 = vsel %vm85, %v84, 0
    %v89 = vsel %vm52, %v63, 0
    %91 = vmatprep.subr.mxu0 0.0
    %92 = vmatpush1.msra.mxu0 %v89
    %93 = vmatprep.subr.mxu0 0.0
    %94 = vmatpush1.msra.mxu0 0.0
    %95 = vmatprep.subr.mxu0 0.0
    %96 = vmatpush1.msra.mxu0 0.0
    %97 = vmatprep.subr.mxu0 0.0
    %98 = vmatpush1.msra.mxu0 0.0
    %99 = vmatprep.subr.mxu0 0.0
    %100 = vmatpush1.msra.mxu0 0.0
    %101 = vmatprep.subr.mxu0 0.0
    %102 = vmatpush1.msra.mxu0 0.0
    %103 = vmatprep.subr.mxu0 0.0
    %104 = vmatpush1.msra.mxu0 0.0
    %105 = vmatprep.subr.mxu0 0.0
    %106 = vmatpush1.msra.mxu0 0.0
    %107 = vmatprep.subr.mxu0 0.0
    %108 = vmatpush1.msra.mxu0 0.0
    %109 = vmatprep.subr.mxu0 0.0
    %110 = vmatpush1.msra.mxu0 0.0
    %111 = vmatprep.subr.mxu0 0.0
    %112 = vmatpush1.msra.mxu0 0.0
    %113 = vmatprep.subr.mxu0 0.0
    %114 = vmatpush1.msra.mxu0 0.0
    %115 = vmatprep.subr.mxu0 0.0
    %116 = vmatpush1.msra.mxu0 0.0
    %117 = vmatprep.subr.mxu0 0.0
    %118 = vmatpush1.msra.mxu0 0.0
    %119 = vmatprep.subr.mxu0 0.0
    %120 = vmatpush1.msra.mxu0 0.0
    %121 = vmatprep.subr.mxu0 0.0
    %122 = vmatpush1.msra.mxu0 0.0
    %123 = vmatprep.subr.mxu0 0.0
    %124 = vmatpush1.msra.mxu0 0.0
    %125 = vmatprep.subr.mxu0 0.0
    %126 = vmatpush1.msra.mxu0 0.0
    %127 = vmatprep.subr.mxu0 0.0
    %128 = vmatpush1.msra.mxu0 0.0
    %129 = vmatprep.subr.mxu0 0.0
    %130 = vmatpush1.msra.mxu0 0.0
    %131 = vmatprep.subr.mxu0 0.0
    %132 = vmatpush1.msra.mxu0 0.0
    %133 = vmatprep.subr.mxu0 0.0
    %134 = vmatpush1.msra.mxu0 0.0
    %135 = vmatprep.subr.mxu0 0.0
    %136 = vmatpush1.msra.mxu0 0.0
    %137 = vmatprep.subr.mxu0 0.0
    %138 = vmatpush1.msra.mxu0 0.0
    %139 = vmatprep.subr.mxu0 0.0
    %140 = vmatpush1.msra.mxu0 0.0
    %141 = vmatprep.subr.mxu0 0.0
    %142 = vmatpush1.msra.mxu0 0.0
    %143 = vmatprep.subr.mxu0 0.0
    %144 = vmatpush1.msra.mxu0 0.0
    %145 = vmatprep.subr.mxu0 0.0
    %146 = vmatpush1.msra.mxu0 0.0
    %147 = vmatprep.subr.mxu0 0.0
    %148 = vmatpush1.msra.mxu0 0.0
    %149 = vmatprep.subr.mxu0 0.0
    %150 = vmatpush1.msra.mxu0 0.0
    %151 = vmatprep.subr.mxu0 0.0
    %152 = vmatpush1.msra.mxu0 0.0
    %153 = vmatprep.subr.mxu0 0.0
    %154 = vmatpush1.msra.mxu0 0.0
    %155 = vmatprep.mubr.f32.mxu0 0.0
    %156 = vmatmul.mubr.f32.gmra.mrb[0].mxu0 %v86
    %v157 = vpop.f32.mrb[0].mxu0
    %v158 = vadd.f32 %v69, %v157
    %v159 = vpop.f32.mrb[0].mxu0
    %160 = vdwg.mxu0
    %v161 = vmax.f32 %v158, 0.0
    %v162 = vld [vmem:[%s3] sm:$0xff]
    %vm163 = vcmask 64512
    %v165 = vsel %vm163, %v161, 0
    %167 = vmatprep.subr.mxu0 0.0
    %168 = vmatpush1.msra.mxu0 %v162
    %169 = vmatprep.subr.mxu0 0.0
    %170 = vmatpush1.msra.mxu0 0.0
    %171 = vmatprep.subr.mxu0 0.0
    %172 = vmatpush1.msra.mxu0 0.0
    %173 = vmatprep.subr.mxu0 0.0
    %174 = vmatpush1.msra.mxu0 0.0
    %175 = vmatprep.subr.mxu0 0.0
    %176 = vmatpush1.msra.mxu0 0.0
    %177 = vmatprep.subr.mxu0 0.0
    %178 = vmatpush1.msra.mxu0 0.0
    %179 = vmatprep.subr.mxu0 0.0
    %180 = vmatpush1.msra.mxu0 0.0
    %181 = vmatprep.subr.mxu0 0.0
    %182 = vmatpush1.msra.mxu0 0.0
    %183 = vmatprep.subr.mxu0 0.0
    %184 = vmatpush1.msra.mxu0 0.0
    %185 = vmatprep.subr.mxu0 0.0
    %186 = vmatpush1.msra.mxu0 0.0
    %187 = vmatprep.subr.mxu0 0.0
    %188 = vmatpush1.msra.mxu0 0.0
    %189 = vmatprep.subr.mxu0 0.0
    %190 = vmatpush1.msra.mxu0 0.0
    %191 = vmatprep.subr.mxu0 0.0
    %192 = vmatpush1.msra.mxu0 0.0
    %193 = vmatprep.subr.mxu0 0.0
    %194 = vmatpush1.msra.mxu0 0.0
    %195 = vmatprep.subr.mxu0 0.0
    %196 = vmatpush1.msra.mxu0 0.0
    %197 = vmatprep.subr.mxu0 0.0
    %198 = vmatpush1.msra.mxu0 0.0
    %199 = vmatprep.subr.mxu0 0.0
    %200 = vmatpush1.msra.mxu0 0.0
    %201 = vmatprep.subr.mxu0 0.0
    %202 = vmatpush1.msra.mxu0 0.0
    %203 = vmatprep.subr.mxu0 0.0
    %204 = vmatpush1.msra.mxu0 0.0
    %205 = vmatprep.subr.mxu0 0.0
    %206 = vmatpush1.msra.mxu0 0.0
    %207 = vmatprep.subr.mxu0 0.0
    %208 = vmatpush1.msra.mxu0 0.0
    %209 = vmatprep.subr.mxu0 0.0
    %210 = vmatpush1.msra.mxu0 0.0
    %211 = vmatprep.subr.mxu0 0.0
    %212 = vmatpush1.msra.mxu0 0.0
    %213 = vmatprep.subr.mxu0 0.0
    %214 = vmatpush1.msra.mxu0 0.0
    %215 = vmatprep.subr.mxu0 0.0
    %216 = vmatpush1.msra.mxu0 0.0
    %217 = vmatprep.subr.mxu0 0.0
    %218 = vmatpush1.msra.mxu0 0.0
    %219 = vmatprep.subr.mxu0 0.0
    %220 = vmatpush1.msra.mxu0 0.0
    %221 = vmatprep.subr.mxu0 0.0
    %222 = vmatpush1.msra.mxu0 0.0
    %223 = vmatprep.subr.mxu0 0.0
    %224 = vmatpush1.msra.mxu0 0.0
    %225 = vmatprep.subr.mxu0 0.0
    %226 = vmatpush1.msra.mxu0 0.0
    %227 = vmatprep.subr.mxu0 0.0
    %228 = vmatpush1.msra.mxu0 0.0
    %229 = vmatprep.subr.mxu0 0.0
    %230 = vmatpush1.msra.mxu0 0.0
    %231 = vmatprep.mubr.f32.mxu0 0.0
    %232 = vmatmul.mubr.f32.gmra.mrb[0].mxu0 %v165
    %v233 = vpop.f32.mrb[0].mxu0
    %v234 = vadd.f32 0.0, %v233
    %v235 = vpop.f32.mrb[0].mxu0
    %236 = vdwg.mxu0
    %vm237 = vcmp.lt.s32.totalorder %v74, 8
    %v238 = vxor.u32 %v234, 2147483648
    %v239 = vmul.f32 %v238, 1.442695
    %v240 = vpow.pop %v239
    %v241 = vadd.f32 %v240, 1.0
    %v242 = vrcp.pop %v241
    %v243 = vmul.f32 1.0, %v242
    %v244 = vtanh.pop %v234
    %v245 = vsel %vm237, %v243, %v244
    %vm246 = vcmask 123904
    %247 = vst.msk [vmem:[#allocation7] sm:$0x3] %vm246, %v245
    // Predicated region
    $region26: #{tpu_custom_call.1} parent=1 // pred_check
      _
    $region27: #{tpu_custom_call.1} parent=1 // pred_check_branch
      %249 = sbr.rel (0) target = $region29
    $region28: #{tpu_custom_call.1} parent=1 // pred_region
      %s251 = ssub.s32 32, 32
      %252 = vsyncadd [#allocation4], %s251
      %s254 = sshll.u32 [#allocation7], 4
      %s255 = int_to_ptr.vmem [resolvable:$true] %s254
      %257 = dma.vmem_to_hbm [thread:$0]  %s255, 32, %s4, [#allocation4]
    $region29: #{tpu_custom_call.1} parent=1 // pred_fallthru
      _
    // Predicated region
    $region30: #{tpu_custom_call.1} parent=1 // pred_check
      _
    $region31: #{tpu_custom_call.1} parent=1 // pred_check_branch
      %259 = sbr.rel (0) target = $region33
    $region32: #{tpu_custom_call.1} parent=1 // pred_region
      %260 = dma.done [#allocation4], 32
    $region33: #{tpu_custom_call.1} parent=1 // pred_fallthru
      _
    %261 = vsyncpa [#allocation3], 1
    %262 = vsyncpa [#allocation6], 1
    %263 = vsyncpa [#allocation4], 1

</llo_original>
